<compile_context>
chip_gen: v7x
topology: tpu7x:2x2x1
jax: 0.10.0
libtpu: 0.0.40
codegen_flags: <defaults>
</compile_context>

<pallas_src>
import jax
import jax.numpy as jnp
from jax.experimental import pallas as pl
from jax.experimental.pallas import tpu as pltpu

LANES = 128
SUBLANES = 8


def _round_up(x: int, m: int) -> int:
    return ((x + m - 1) // m) * m


def logistic_kernel(x_ref, w_ref, b_ref, o_ref):
    # w_ref / b_ref are (1, 1) f32 scalars living in SMEM.
    w = w_ref[0, 0]
    b = b_ref[0, 0]
    z = x_ref[...] * w + b                 # linear: x @ W^T + b (1x1 weight)
    # Exact sigmoid: exp + divide both ride the EUP slot; kernel is mem-bound,
    # so exact precision costs zero wall-clock (approx reciprocal was not).
    o_ref[...] = 1.0 / (1.0 + jnp.exp(-z))


def logistic_forward(x, w, b, *, tile_rows=4096, min_pallas_elems=65536):
    """x: (N, 1) f32; w: (1, 1) f32; b: (1,) f32 -> (N, 1) f32."""
    n, f = x.shape
    assert f == 1

    w_s = jnp.asarray(w, jnp.float32).reshape(1, 1)
    b_s = jnp.asarray(b, jnp.float32).reshape(1, 1)

    if n < min_pallas_elems:
        # Small-batch fast path: one fused XLA elementwise op beats the
        # repack + pallas_call launch overhead.
        return jax.nn.sigmoid(x.astype(jnp.float32) * w_s[0, 0] + b_s[0, 0])

    # ---- lane-dense repack: (N, 1) -> (rows, 128) slab ----------------------
    x_flat = x.astype(jnp.float32).reshape(-1)
    rows = pl.cdiv(n, LANES)
    rem = n % LANES
    if rem == 0:
        x_slab = x_flat.reshape(rows, LANES)                # zero-copy reshape
    else:
        # Ragged N: pad only the missing tail lanes (< 128 extra elements).
        x_slab = jnp.pad(x_flat, (0, LANES - rem)).reshape(rows, LANES)

    tile_rows = max(_round_up(tile_rows, SUBLANES), SUBLANES)
    tr = rows if rows <= tile_rows else tile_rows           # full-array block if small
    grid = (pl.cdiv(rows, tr),)                             # ragged last block is masked

    out_slab = pl.pallas_call(
        logistic_kernel,
        out_shape=jax.ShapeDtypeStruct((rows, LANES), jnp.float32),
        grid_spec=pltpu.PrefetchScalarGridSpec(
            num_scalar_prefetch=0,
            grid=grid,
            in_specs=[
                pl.BlockSpec((tr, LANES), lambda i: (i, 0)),
                pl.BlockSpec(memory_space=pltpu.MemorySpace.SMEM),
                pl.BlockSpec(memory_space=pltpu.MemorySpace.SMEM),
            ],
            out_specs=pl.BlockSpec((tr, LANES), lambda i: (i, 0)),
        ),
        compiler_params=pltpu.CompilerParams(
            dimension_semantics=("parallel",),
        ),
    )(x_slab, w_s, b_s)

    if rem == 0:
        return out_slab.reshape(n, 1)                       # zero-copy
    return out_slab.reshape(-1)[:n].reshape(n, 1)


if __name__ == "__main__":
    key = jax.random.PRNGKey(0)
    kx, kw, kb, kx2, kx3 = jax.random.split(key, 5)

    # Deterministic parameters (mimics nn.Linear(1, 1) init).
    w = jax.random.uniform(kw, (1, 1), minval=-1.0, maxval=1.0, dtype=jnp.float32)
    b = jax.random.uniform(kb, (1,), minval=-1.0, maxval=1.0, dtype=jnp.float32)

    def ref(xx):
        return jax.nn.sigmoid(xx @ w.T + b)

    # Small demo batch on the Pallas path (force past the small-N fast path).
    batch = 8
    x = jax.random.normal(kx, (batch, 1), dtype=jnp.float32)
    y = logistic_forward(x, w, b, min_pallas_elems=0)
    jax.block_until_ready(y)
    assert y.shape == (batch, 1)
    assert jnp.allclose(y, ref(x), atol=1e-4, rtol=1e-4), (y, ref(x))

    # Lane-aligned multi-tile grid path (zero-copy repack, grid=(2,)).
    batch2 = 2048
    x2 = jax.random.normal(kx2, (batch2, 1), dtype=jnp.float32)
    y2 = logistic_forward(x2, w, b, tile_rows=8, min_pallas_elems=0)
    jax.block_until_ready(y2)
    assert jnp.allclose(y2, ref(x2), atol=1e-4, rtol=1e-4)

    # Ragged N + ragged last grid block (exercises Pallas OOB masking).
    batch3 = 1300
    x3 = jax.random.normal(kx3, (batch3, 1), dtype=jnp.float32)
    y3 = logistic_forward(x3, w, b, tile_rows=8, min_pallas_elems=0)
    jax.block_until_ready(y3)
    assert jnp.allclose(y3, ref(x3), atol=1e-4, rtol=1e-4)

    # Small-N fast path (pure XLA) for completeness.
    y_fast = logistic_forward(x, w, b)
    jax.block_until_ready(y_fast)
    assert jnp.allclose(y_fast, ref(x), atol=1e-4, rtol=1e-4)

    print("KERNEL_OK")
</pallas_src>

<mosaic_0001>
module attributes {stable_mosaic.version = 11 : i64} {
  func.func @logistic_kernel(%arg0: i32, %arg1: memref<1x128xf32, #tpu.memory_space<vmem>>, %arg2: memref<1x1xf32, #tpu.memory_space<smem>>, %arg3: memref<1x1xf32, #tpu.memory_space<smem>>, %arg4: memref<1x128xf32, #tpu.memory_space<vmem>>) attributes {dimension_semantics = [#tpu.dimension_semantics<parallel>], iteration_bounds = array<i64: 1>, scalar_prefetch = 0 : i64, scratch_operands = 0 : i64, tpu.core_type = #tpu.core_type<tc>, window_params = [{transform_indices = @transform_0, window_bounds = array<i64: 1, 128>}, {transform_indices = @transform_1, window_bounds = array<i64: 1, 1>}, {transform_indices = @transform_2, window_bounds = array<i64: 1, 1>}, {transform_indices = @transform_3, window_bounds = array<i64: 1, 128>}]} {
    %c0 = arith.constant 0 : index
    %c0_0 = arith.constant 0 : index
    %0 = memref.load %arg2[%c0, %c0_0] : memref<1x1xf32, #tpu.memory_space<smem>>
    %c0_1 = arith.constant 0 : index
    %c0_2 = arith.constant 0 : index
    %1 = memref.load %arg3[%c0_1, %c0_2] : memref<1x1xf32, #tpu.memory_space<smem>>
    %c0_3 = arith.constant 0 : index
    %c0_4 = arith.constant 0 : index
    %2 = vector.load %arg1[%c0_3, %c0_4] : memref<1x128xf32, #tpu.memory_space<vmem>>, vector<1x128xf32>
    %3 = vector.broadcast %0 : f32 to vector<1x128xf32>
    %4 = arith.mulf %2, %3 : vector<1x128xf32>
    %5 = vector.broadcast %1 : f32 to vector<1x128xf32>
    %6 = arith.addf %4, %5 : vector<1x128xf32>
    %cst = arith.constant 0.000000e+00 : f32
    %7 = vector.broadcast %cst : f32 to vector<1x128xf32>
    %8 = arith.subf %7, %6 : vector<1x128xf32>
    %9 = math.exp %8 : vector<1x128xf32>
    %cst_5 = arith.constant 1.000000e+00 : f32
    %10 = vector.broadcast %cst_5 : f32 to vector<1x128xf32>
    %11 = arith.addf %10, %9 : vector<1x128xf32>
    %cst_6 = arith.constant 1.000000e+00 : f32
    %12 = vector.broadcast %cst_6 : f32 to vector<1x128xf32>
    %13 = arith.divf %12, %11 : vector<1x128xf32>
    %c0_7 = arith.constant 0 : index
    %c0_8 = arith.constant 0 : index
    %14 = vector.load %arg4[%c0_7, %c0_8] : memref<1x128xf32, #tpu.memory_space<vmem>>, vector<1x128xf32>
    tpu.vector_store %arg4[%c0_7, %c0_8], %13 {strides = array<i32>} : memref<1x128xf32, #tpu.memory_space<vmem>>, vector<1x128xf32>,
    return
  }
  func.func @transform_0(%arg0: i32) -> (i32, i32) {
    %c0_i32 = arith.constant 0 : i32
    %c0_i32_0 = arith.constant 0 : i32
    return %arg0, %c0_i32 : i32, i32
  }
  func.func @transform_1(%arg0: i32) -> (i32, i32) {
    %c0_i32 = arith.constant 0 : i32
    %c0_i32_0 = arith.constant 0 : i32
    %c0_i32_1 = arith.constant 0 : i32
    return %c0_i32, %c0_i32_0 : i32, i32
  }
  func.func @transform_2(%arg0: i32) -> (i32, i32) {
    %c0_i32 = arith.constant 0 : i32
    %c0_i32_0 = arith.constant 0 : i32
    %c0_i32_1 = arith.constant 0 : i32
    return %c0_i32, %c0_i32_0 : i32, i32
  }
  func.func @transform_3(%arg0: i32) -> (i32, i32) {
    %c0_i32 = arith.constant 0 : i32
    %c0_i32_0 = arith.constant 0 : i32
    return %arg0, %c0_i32 : i32, i32
  }
}

</mosaic_0001>

<llo_original>
// kernel: tpu_custom_call.1
$region0: #{tpu_custom_call.1}
  #allocation0 [shape = 'u32[]', space=smem, size = 0x4, offset = 0x4, fixed_abs, tag = 'smem constant byte address 0x4 - core index']
  #allocation1 [shape = 'u32[144,128]{1,0:T(1,128)}', space=vmem, size = 0x12000, scoped, tag = 'internal scratch']
  #allocation2 [shape = 'f32[1,1]{1,0:T(1,128)S(6)}', space=smem, size = 0x200, scoped, tag = 'scoped memory for tpu_custom_call.1']
  #allocation3 [shape = 'f32[1,1]{1,0:T(1,128)S(6)}', space=smem, size = 0x200, scoped, tag = 'scoped memory for tpu_custom_call.1']
  %s0 = inlined_call_operand.vmem [shape: f32[1,128], index: 0, kind: input, shape index: {}]
  %s1 = inlined_call_operand.<no memory space> [shape: f32[1,1], index: 1, kind: input, shape index: {}]
  %s2 = inlined_call_operand.<no memory space> [shape: f32[1,1], index: 2, kind: input, shape index: {}]
  %s3 = inlined_call_operand.hbm [shape: f32[1,128], index: 3, kind: output, shape index: {}]
  %s4 = sld [smem:[#allocation0]]
  $region22: #{tpu_custom_call.1} parent=0
    _
  %s6 = ssub.s32 1, %s4
  %s7 = scalar_select 0, %s6, %s4
  %8 = sst [smem:[#allocation2]] %s1
  %9 = sst [smem:[#allocation3]] %s2
  $region1: #{tpu_custom_call.1} parent=0
    #allocation4 [shape = 'u8[512]{0}', space=vmem, size = 0x400, scoped, tag = 'output window, operand 0, single buffered']
    #allocation5 [shape = 's32[1]{0}', space=sflag, size = 0x4, scoped, tag = 'scoped memory for tpu_custom_call.1']
    %10 = vsyncpa [#allocation5], 0
    // Predicated region
    $region2: #{tpu_custom_call.1} parent=1 // pred_check
      _
    $region3: #{tpu_custom_call.1} parent=1 // pred_check_branch
      %12 = sbr.rel (0) target = $region5
    $region4: #{tpu_custom_call.1} parent=1 // pred_region
      _
    $region5: #{tpu_custom_call.1} parent=1 // pred_fallthru
      _
    // Predicated region
    $region6: #{tpu_custom_call.1} parent=1 // pred_check
      _
    $region7: #{tpu_custom_call.1} parent=1 // pred_check_branch
      %14 = sbr.rel (0) target = $region9
    $region8: #{tpu_custom_call.1} parent=1 // pred_region
      _
    $region9: #{tpu_custom_call.1} parent=1 // pred_fallthru
      _
    // Predicated region
    $region10: #{tpu_custom_call.1} parent=1 // pred_check
      _
    $region11: #{tpu_custom_call.1} parent=1 // pred_check_branch
      %16 = sbr.rel (0) target = $region13
    $region12: #{tpu_custom_call.1} parent=1 // pred_region
      _
    $region13: #{tpu_custom_call.1} parent=1 // pred_fallthru
      _
    %s17 = sld [smem:[#allocation2]]
    %s18 = sld [smem:[#allocation3]]
    %v19 = vld [vmem:[%s0] sm:$0x1]
    %v20 = vstv %s17
    %v21 = vmul.f32 %v19, %v20
    %v22 = vstv %s18
    %v23 = vadd.f32 %v21, %v22
    %v24 = vsub.f32 0.0, %v23
    %v25 = vmul.f32 %v24, 1.442695
    %v26 = vpow.pop %v25
    %v27 = vadd.f32 %v26, 1.0
    %v28 = vrcp.pop %v27
    %v29 = vmul.f32 1.0, %v28
    %30 = vst [vmem:[#allocation4] sm:$0x1] %v29
    // Predicated region
    $region14: #{tpu_custom_call.1} parent=1 // pred_check
      _
    $region15: #{tpu_custom_call.1} parent=1 // pred_check_branch
      %32 = sbr.rel (0) target = $region17
    $region16: #{tpu_custom_call.1} parent=1 // pred_region
      %s34 = ssub.s32 16, 16
      %35 = vsyncadd [#allocation5], %s34
      %s37 = sshll.u32 [#allocation4], 4
      %s38 = int_to_ptr.vmem [resolvable:$true] %s37
      %40 = dma.vmem_to_hbm [thread:$0]  %s38, 16, %s3, [#allocation5]
    $region17: #{tpu_custom_call.1} parent=1 // pred_fallthru
      _
    // Predicated region
    $region18: #{tpu_custom_call.1} parent=1 // pred_check
      _
    $region19: #{tpu_custom_call.1} parent=1 // pred_check_branch
      %42 = sbr.rel (0) target = $region21
    $region20: #{tpu_custom_call.1} parent=1 // pred_region
      %43 = dma.done [#allocation5], 16
    $region21: #{tpu_custom_call.1} parent=1 // pred_fallthru
      _
    %44 = vsyncpa [#allocation5], 1

</llo_original>
